<compile_context>
chip_gen: v5e
topology: v5e:2x2
jax: 0.10.0
libtpu: 0.0.40
codegen_flags: <defaults>
</compile_context>

<pallas_src>
import jax
import jax.numpy as jnp
from jax import lax
from jax.experimental import pallas as pl
from jax.experimental.pallas import tpu as pltpu


def _residual_conv_kernel(x_ref, wband_ref, bias_ref, out_ref):
    """Fused 3x3 same-conv + bias + residual add on a folded (H, W*C) layout.

    x_ref     : (1, H, WC)   unpadded activations for one batch (VMEM-resident)
    wband_ref : (3, WC, WC)  block-banded weights, one (WC, WC) band per dy tap
    bias_ref  : (1, WC)      bias tiled along W (lane-dense)
    out_ref   : (1, tH, WC)  output row tile
    """
    _, H, WC = x_ref.shape
    tH = out_ref.shape[1]
    h = pl.program_id(1)
    y0 = pl.multiple_of(h * tH, tH)

    # Rows y0 .. y0+tH-1 ; this slab is also the residual.
    center = x_ref[0, pl.ds(y0, tH), :]

    # dy = -1 slab: row r holds x[y0+r-1]; zero for the image's first row.
    top = x_ref[0, pl.ds(jnp.maximum(y0 - 1, 0), 1), :]
    top = top * (y0 > 0).astype(top.dtype)
    up = jnp.concatenate([top, center[:-1, :]], axis=0)

    # dy = +1 slab: row r holds x[y0+r+1]; zero for the image's last row.
    bot = x_ref[0, pl.ds(jnp.minimum(y0 + tH, H - 1), 1), :]
    bot = bot * (y0 + tH < H).astype(bot.dtype)
    down = jnp.concatenate([center[1:, :], bot], axis=0)

    # Bias folded into the accumulator init; three deep MXU matmuls (K = WC).
    acc = bias_ref[...] + jnp.dot(center, wband_ref[1],
                                  preferred_element_type=jnp.float32)
    acc = acc + jnp.dot(up, wband_ref[0], preferred_element_type=jnp.float32)
    acc = acc + jnp.dot(down, wband_ref[2], preferred_element_type=jnp.float32)

    # Residual add (residual == center slab) and lane-dense store.
    out_ref[0, :, :] = (center + acc).astype(out_ref.dtype)


def _fold_conv_weights(w_hwio, W):
    """(3, 3, Ci, Co) HWIO weights -> (3, W*Ci, W*Co) block-banded matrices.

    band[dy][(x+dx-1)*Ci + ci, x*Co + co] = w[dy, dx, ci, co] for x+dx-1 in
    [0, W); missing off-edge blocks implement the conv's zero padding along W.
    """
    kh, kw, Ci, Co = w_hwio.shape
    bands = []
    for dy in range(kh):
        m = jnp.zeros((W * Ci, W * Co), w_hwio.dtype)
        for dx in range(kw):
            off = dx - (kw // 2)
            sel = jnp.eye(W, k=-off, dtype=w_hwio.dtype)   # sel[x+off, x] = 1
            m = m + jnp.einsum('ab,io->aibo', sel,
                               w_hwio[dy, dx]).reshape(W * Ci, W * Co)
        bands.append(m)
    return jnp.stack(bands, axis=0)


def residual_block_conv3x3(x_nchw, w_hwio, bias, *, tile_h=8):
    """y = x + conv3x3_same(x); NCHW in/out like the PyTorch module."""
    B, C, H, W = x_nchw.shape
    WC = W * C
    if H % tile_h != 0:
        tile_h = H                          # fall back to one row tile / batch

    # NCHW -> NHWC -> folded (B, H, W*C).  W*C = 128 here -> fully lane-dense.
    # TODO(synk): if the surrounding model keeps NHWC (or the folded layout),
    # these two transposes (full HBM relayout passes) disappear entirely.
    # TODO(synk): bf16 storage for x / wband is a further ~2x at the HBM
    # roofline on v6e/v7x if the precision budget allows (accumulate stays f32).
    x_f = jnp.transpose(x_nchw, (0, 2, 3, 1)).reshape(B, H, WC)
    wband = _fold_conv_weights(w_hwio, W)           # (3, WC, WC), built once
    bias_f = jnp.tile(bias, W).reshape(1, WC)

    grid = (B, H // tile_h)
    out_f = pl.pallas_call(
        _residual_conv_kernel,
        out_shape=jax.ShapeDtypeStruct((B, H, WC), x_f.dtype),
        grid=grid,
        in_specs=[
            # Per-batch activations: same block index for every h step ->
            # DMA'd from HBM once per batch and kept resident in VMEM.
            pl.BlockSpec((1, H, WC), lambda b, h: (b, 0, 0)),
            pl.BlockSpec((3, WC, WC), lambda b, h: (0, 0, 0)),
            pl.BlockSpec((1, WC), lambda b, h: (0, 0)),
        ],
        out_specs=pl.BlockSpec((1, tile_h, WC), lambda b, h: (b, h, 0)),
        compiler_params=pltpu.CompilerParams(
            dimension_semantics=("parallel", "parallel")),
    )(x_f, wband, bias_f)

    return jnp.transpose(out_f.reshape(B, H, W, C), (0, 3, 1, 2))


def _reference(x_nchw, w_hwio, bias):
    """Pure-JAX reference: x + conv3x3(x) (same semantics as the PyTorch module)."""
    x_nhwc = jnp.transpose(x_nchw, (0, 2, 3, 1))
    y = lax.conv_general_dilated(
        x_nhwc, w_hwio, window_strides=(1, 1), padding="SAME",
        dimension_numbers=("NHWC", "HWIO", "NHWC"))
    y = y + bias.reshape(1, 1, 1, -1)
    return x_nchw + jnp.transpose(y, (0, 3, 1, 2))


if __name__ == "__main__":
    B, C, H, W = 2, 8, 16, 16        # W*C = 128 -> lane-dense folded layout
    key = jax.random.PRNGKey(0)
    kx, kw, kb = jax.random.split(key, 3)

    x = jax.random.normal(kx, (B, C, H, W), dtype=jnp.float32)
    # Deterministic synthetic parameters (Conv2d(C, C, 3, padding=1)).
    w_hwio = jax.random.normal(kw, (3, 3, C, C), dtype=jnp.float32) * 0.1
    bias = jax.random.normal(kb, (C,), dtype=jnp.float32) * 0.1

    out = residual_block_conv3x3(x, w_hwio, bias)
    out = jax.block_until_ready(out)

    ref = _reference(x, w_hwio, bias)
    assert out.shape == (B, C, H, W)
    assert jnp.allclose(out, ref, atol=1e-4, rtol=1e-4), float(
        jnp.max(jnp.abs(out - ref)))

    print("KERNEL_OK")
</pallas_src>

<mosaic_0001>
module attributes {stable_mosaic.version = 11 : i64} {
  func.func @_residual_conv_kernel(%arg0: i32, %arg1: i32, %arg2: memref<1x16x128xf32, #tpu.memory_space<vmem>>, %arg3: memref<3x128x128xf32, #tpu.memory_space<vmem>>, %arg4: memref<1x128xf32, #tpu.memory_space<vmem>>, %arg5: memref<1x8x128xf32, #tpu.memory_space<vmem>>) attributes {dimension_semantics = [#tpu.dimension_semantics<parallel>, #tpu.dimension_semantics<parallel>], iteration_bounds = array<i64: 2, 2>, scalar_prefetch = 0 : i64, scratch_operands = 0 : i64, tpu.core_type = #tpu.core_type<tc>, window_params = [{transform_indices = @transform_0, window_bounds = array<i64: 1, 16, 128>}, {pipeline_mode = #tpu.pipeline_mode<synchronous>, transform_indices = @transform_1, window_bounds = array<i64: 3, 128, 128>}, {pipeline_mode = #tpu.pipeline_mode<synchronous>, transform_indices = @transform_2, window_bounds = array<i64: 1, 128>}, {transform_indices = @transform_3, window_bounds = array<i64: 1, 8, 128>}]} {
    %c8_i32 = arith.constant 8 : i32
    %0 = arith.muli %arg1, %c8_i32 : i32
    %1 = tpu.assume_multiple %0, 8 : i32
    %c0 = arith.constant 0 : index
    %2 = arith.index_cast %1 : i32 to index
    %c0_0 = arith.constant 0 : index
    %3 = vector.load %arg2[%c0, %2, %c0_0] : memref<1x16x128xf32, #tpu.memory_space<vmem>>, vector<1x8x128xf32>
    %4 = vector.shape_cast %3 : vector<1x8x128xf32> to vector<8x128xf32>
    %c1_i32 = arith.constant 1 : i32
    %5 = arith.subi %1, %c1_i32 : i32
    %c0_i32 = arith.constant 0 : i32
    %6 = arith.maxsi %5, %c0_i32 : i32
    %c0_1 = arith.constant 0 : index
    %7 = arith.index_cast %6 : i32 to index
    %c0_2 = arith.constant 0 : index
    %8 = vector.load %arg2[%c0_1, %7, %c0_2] : memref<1x16x128xf32, #tpu.memory_space<vmem>>, vector<1x1x128xf32>
    %9 = vector.shape_cast %8 : vector<1x1x128xf32> to vector<1x128xf32>
    %c0_i32_3 = arith.constant 0 : i32
    %10 = arith.cmpi sgt, %1, %c0_i32_3 : i32
    %11 = arith.extui %10 : i1 to i32
    %12 = arith.sitofp %11 : i32 to f32
    %13 = vector.broadcast %12 : f32 to vector<1x128xf32>
    %14 = arith.mulf %9, %13 : vector<1x128xf32>
    %15 = vector.extract_strided_slice %4 {offsets = [0, 0], sizes = [7, 128], strides = [1, 1]} : vector<8x128xf32> to vector<7x128xf32>
    %16 = tpu.concatenate %14, %15 in 0 : vector<1x128xf32>, vector<7x128xf32> -> vector<8x128xf32>
    %c8_i32_4 = arith.constant 8 : i32
    %17 = arith.addi %1, %c8_i32_4 : i32
    %c15_i32 = arith.constant 15 : i32
    %18 = arith.minsi %17, %c15_i32 : i32
    %c0_5 = arith.constant 0 : index
    %19 = arith.index_cast %18 : i32 to index
    %c0_6 = arith.constant 0 : index
    %20 = vector.load %arg2[%c0_5, %19, %c0_6] : memref<1x16x128xf32, #tpu.memory_space<vmem>>, vector<1x1x128xf32>
    %21 = vector.shape_cast %20 : vector<1x1x128xf32> to vector<1x128xf32>
    %c8_i32_7 = arith.constant 8 : i32
    %22 = arith.addi %1, %c8_i32_7 : i32
    %c16_i32 = arith.constant 16 : i32
    %23 = arith.cmpi slt, %22, %c16_i32 : i32
    %24 = arith.extui %23 : i1 to i32
    %25 = arith.sitofp %24 : i32 to f32
    %26 = vector.broadcast %25 : f32 to vector<1x128xf32>
    %27 = arith.mulf %21, %26 : vector<1x128xf32>
    %28 = vector.extract_strided_slice %4 {offsets = [1, 0], sizes = [7, 128], strides = [1, 1]} : vector<8x128xf32> to vector<7x128xf32>
    %29 = tpu.concatenate %28, %27 in 0 : vector<7x128xf32>, vector<1x128xf32> -> vector<8x128xf32>
    %c0_8 = arith.constant 0 : index
    %c0_9 = arith.constant 0 : index
    %30 = vector.load %arg4[%c0_8, %c0_9] : memref<1x128xf32, #tpu.memory_space<vmem>>, vector<1x128xf32>
    %c1 = arith.constant 1 : index
    %c0_10 = arith.constant 0 : index
    %c0_11 = arith.constant 0 : index
    %31 = vector.load %arg3[%c1, %c0_10, %c0_11] : memref<3x128x128xf32, #tpu.memory_space<vmem>>, vector<1x128x128xf32>
    %32 = vector.shape_cast %31 : vector<1x128x128xf32> to vector<128x128xf32>
    %cst = arith.constant dense<0.000000e+00> : vector<8x128xf32>
    %33 = tpu.matmul %4, %32, %cst {dimension_numbers = #tpu.dot_dimension_numbers<[1], [0], [0], [1], [0, 0, 1, 1], [], []>} : vector<8x128xf32>, vector<128x128xf32>, vector<8x128xf32> -> vector<8x128xf32>
    %34 = vector.broadcast %30 : vector<1x128xf32> to vector<8x128xf32>
    %35 = arith.addf %34, %33 : vector<8x128xf32>
    %c0_12 = arith.constant 0 : index
    %c0_13 = arith.constant 0 : index
    %c0_14 = arith.constant 0 : index
    %36 = vector.load %arg3[%c0_12, %c0_13, %c0_14] : memref<3x128x128xf32, #tpu.memory_space<vmem>>, vector<1x128x128xf32>
    %37 = vector.shape_cast %36 : vector<1x128x128xf32> to vector<128x128xf32>
    %cst_15 = arith.constant dense<0.000000e+00> : vector<8x128xf32>
    %38 = tpu.matmul %16, %37, %cst_15 {dimension_numbers = #tpu.dot_dimension_numbers<[1], [0], [0], [1], [0, 0, 1, 1], [], []>} : vector<8x128xf32>, vector<128x128xf32>, vector<8x128xf32> -> vector<8x128xf32>
    %39 = arith.addf %35, %38 : vector<8x128xf32>
    %c2 = arith.constant 2 : index
    %c0_16 = arith.constant 0 : index
    %c0_17 = arith.constant 0 : index
    %40 = vector.load %arg3[%c2, %c0_16, %c0_17] : memref<3x128x128xf32, #tpu.memory_space<vmem>>, vector<1x128x128xf32>
    %41 = vector.shape_cast %40 : vector<1x128x128xf32> to vector<128x128xf32>
    %cst_18 = arith.constant dense<0.000000e+00> : vector<8x128xf32>
    %42 = tpu.matmul %29, %41, %cst_18 {dimension_numbers = #tpu.dot_dimension_numbers<[1], [0], [0], [1], [0, 0, 1, 1], [], []>} : vector<8x128xf32>, vector<128x128xf32>, vector<8x128xf32> -> vector<8x128xf32>
    %43 = arith.addf %39, %42 : vector<8x128xf32>
    %44 = arith.addf %4, %43 : vector<8x128xf32>
    %c0_19 = arith.constant 0 : index
    %c0_20 = arith.constant 0 : index
    %c0_21 = arith.constant 0 : index
    %45 = vector.load %arg5[%c0_19, %c0_20, %c0_21] : memref<1x8x128xf32, #tpu.memory_space<vmem>>, vector<1x8x128xf32>
    %46 = vector.shape_cast %45 : vector<1x8x128xf32> to vector<8x128xf32>
    %47 = vector.shape_cast %44 : vector<8x128xf32> to vector<1x8x128xf32>
    tpu.vector_store %arg5[%c0_19, %c0_20, %c0_21], %47 {strides = array<i32>} : memref<1x8x128xf32, #tpu.memory_space<vmem>>, vector<1x8x128xf32>,
    return
  }
  func.func @transform_0(%arg0: i32, %arg1: i32) -> (i32, i32, i32) {
    %c0_i32 = arith.constant 0 : i32
    %c0_i32_0 = arith.constant 0 : i32
    %c0_i32_1 = arith.constant 0 : i32
    return %arg0, %c0_i32, %c0_i32_0 : i32, i32, i32
  }
  func.func @transform_1(%arg0: i32, %arg1: i32) -> (i32, i32, i32) {
    %c0_i32 = arith.constant 0 : i32
    %c0_i32_0 = arith.constant 0 : i32
    %c0_i32_1 = arith.constant 0 : i32
    %c0_i32_2 = arith.constant 0 : i32
    return %c0_i32, %c0_i32_0, %c0_i32_1 : i32, i32, i32
  }
  func.func @transform_2(%arg0: i32, %arg1: i32) -> (i32, i32) {
    %c0_i32 = arith.constant 0 : i32
    %c0_i32_0 = arith.constant 0 : i32
    %c0_i32_1 = arith.constant 0 : i32
    return %c0_i32, %c0_i32_0 : i32, i32
  }
  func.func @transform_3(%arg0: i32, %arg1: i32) -> (i32, i32, i32) {
    %c0_i32 = arith.constant 0 : i32
    %c0_i32_0 = arith.constant 0 : i32
    return %arg0, %arg1, %c0_i32 : i32, i32, i32
  }
}

</mosaic_0001>

<llo_original>
// kernel: tpu_custom_call.1
$region0: #{tpu_custom_call.1}
  #allocation0 [shape = 'u32[]', space=smem, size = 0x4, offset = 0x4, fixed_abs, tag = 'smem constant byte address 0x4 - core index']
  #allocation1 [shape = 'u32[72,128]{1,0:T(1,128)}', space=vmem, size = 0x9000, scoped, tag = 'internal scratch']
  %s0 = inlined_call_operand.hbm [shape: f32[2,16,128], index: 0, kind: input, shape index: {}]
  %s1 = inlined_call_operand.hbm [shape: f32[3,128,128], index: 1, kind: input, shape index: {}]
  %s2 = inlined_call_operand.vmem [shape: f32[1,128], index: 2, kind: input, shape index: {}]
  %s3 = inlined_call_operand.hbm [shape: f32[2,16,128], index: 3, kind: output, shape index: {}]
  %s4 = sld [smem:[#allocation0]]
  $region53: #{tpu_custom_call.1} parent=0
    _
  %s6 = ssub.s32 1, %s4
  %s7 = scalar_select 0, %s6, %s4
  $region1: #{tpu_custom_call.1} parent=0
    #allocation2 [shape = 'u8[16384]{0}', space=vmem, size = 0x4000, scoped, tag = 'input window, operand 0']
    #allocation3 [shape = 's32[2]{0}', space=sflag, size = 0x8, scoped, tag = 'scoped memory for tpu_custom_call.1']
    #allocation4 [shape = 's32[2]{0}', space=sflag, size = 0x8, scoped, tag = 'scoped memory for tpu_custom_call.1']
    #allocation5 [shape = 'u8[196608]{0}', space=vmem, size = 0x30000, scoped, tag = 'input window, operand 1, single buffered']
    #allocation6 [shape = 's32[1]{0}', space=sflag, size = 0x4, scoped, tag = 'scoped memory for tpu_custom_call.1']
    #allocation7 [shape = 'u8[8192]{0}', space=vmem, size = 0x2000, scoped, tag = 'output window, operand 0']
    %8 = vsyncpa [#allocation3], 0
    %s9 = scalar_lea.sflag [#allocation3], 1
    %10 = vsyncpa %s9, 0
    %11 = vsyncpa [#allocation6], 0
    %12 = vsyncpa [#allocation4], 0
    %s13 = scalar_lea.sflag [#allocation4], 1
    %14 = vsyncpa %s13, 0
    loop: start=0, step=1, limit=6
    $region2: #{tpu_custom_call.1} parent=1 // loop_pre_header
      _
    $region3: #{tpu_custom_call.1} parent=1 // loop_header
      %s16 = sphi 0, %s20
      %p17 = scmp.ge.s32.totalorder %s16, 6
      %s23 = sphi 0, %s35
      %s24 = sphi 0, %s31
      %s25 = sphi 0, %s23
      %s26 = sphi 0, %s24
      %s27 = sphi 0, %s25
      %s28 = sphi 0, %s26
      %s38 = sphi 0, %s40
      %s41 = sphi 0, %s38
      %s42 = sphi 0, %s41
      %s58 = sphi 0, %s42
      %s62 = sphi 0, %s62
      %s64 = sphi 0, %s62
      %s65 = sphi 0, %s64
      %s79 = sphi 0, %s65
      %s83 = sphi 0, %s83
      %s85 = sphi 0, %s83
      %s86 = sphi 0, %s85
      %s100 = sphi 0, %s86
      %s108 = sphi 0, %s110
      %s111 = sphi 0, %s108
      %s112 = sphi 0, %s111
      %s128 = sphi 0, %s112
    $region4: #{tpu_custom_call.1} parent=1 // loop_header_branch
      %19 = sbr.rel (%p17) target = $region8
    $region5: #{tpu_custom_call.1} parent=1 // loop_body
      %s21 = ssub.s32 %s16, 1
      %s22 = ssub.s32 %s16, 2
      %s29 = sadd.s32 1, %s24
      %p30 = scmp.ge.s32.totalorder %s29, 2
      %s31 = scalar_select %p30, 0, %s29
      %s32 = sadd.s32 1, %s23
      %s33 = scalar_select %p30, %s32, %s23
      %p34 = scmp.ge.s32.totalorder %s33, 2
      %s35 = scalar_select %p34, 0, %s33
      %s36 = ssub.s32 %s23, %s35
      %p37 = scmp.eq.s32.totalorder %s36, 0
      %s39 = sadd.s32 %s38, 1
      %s40 = scalar_select %p37, %s38, %s39
      %p43 = pneg %p37
      %p44 = scmp.eq.s32.totalorder %s16, 3
      %p45 = por %p43, %p44
      %p46 = scmp.ne.s32.totalorder %s38, %s41
      %p47 = scmp.eq.s32.totalorder %s16, 0
      %p48 = por %p46, %p47
      %p49 = scmp.ne.s32.totalorder %s38, %s41
      %p50 = scmp.eq.s32.totalorder %s21, 3
      %p51 = por %p49, %p50
      %p52 = scmp.ne.s32.totalorder %s41, %s42
      %p53 = scmp.eq.s32.totalorder %s21, 0
      %p54 = por %p52, %p53
      %p55 = scmp.ne.s32.totalorder %s41, %s42
      %p56 = scmp.eq.s32.totalorder %s22, 3
      %p57 = por %p55, %p56
      %p59 = scmp.ne.s32.totalorder %s42, %s58
      %p60 = scmp.eq.s32.totalorder %s22, 0
      %p61 = por %p59, %p60
      %s63 = sadd.s32 %s62, 1
      %p66 = scmp.eq.s32.totalorder %s16, 3
      %p67 = scmp.ne.s32.totalorder %s62, %s64
      %p68 = scmp.eq.s32.totalorder %s16, 0
      %p69 = por %p67, %p68
      %p70 = scmp.ne.s32.totalorder %s62, %s64
      %p71 = scmp.eq.s32.totalorder %s21, 3
      %p72 = por %p70, %p71
      %p73 = scmp.ne.s32.totalorder %s64, %s65
      %p74 = scmp.eq.s32.totalorder %s21, 0
      %p75 = por %p73, %p74
      %p76 = scmp.ne.s32.totalorder %s64, %s65
      %p77 = scmp.eq.s32.totalorder %s22, 3
      %p78 = por %p76, %p77
      %p80 = scmp.ne.s32.totalorder %s65, %s79
      %p81 = scmp.eq.s32.totalorder %s22, 0
      %p82 = por %p80, %p81
      %s84 = sadd.s32 %s83, 1
      %p87 = scmp.eq.s32.totalorder %s16, 3
      %p88 = scmp.ne.s32.totalorder %s83, %s85
      %p89 = scmp.eq.s32.totalorder %s16, 0
      %p90 = por %p88, %p89
      %p91 = scmp.ne.s32.totalorder %s83, %s85
      %p92 = scmp.eq.s32.totalorder %s21, 3
      %p93 = por %p91, %p92
      %p94 = scmp.ne.s32.totalorder %s85, %s86
      %p95 = scmp.eq.s32.totalorder %s21, 0
      %p96 = por %p94, %p95
      %p97 = scmp.ne.s32.totalorder %s85, %s86
      %p98 = scmp.eq.s32.totalorder %s22, 3
      %p99 = por %p97, %p98
      %p101 = scmp.ne.s32.totalorder %s86, %s100
      %p102 = scmp.eq.s32.totalorder %s22, 0
      %p103 = por %p101, %p102
      %s104 = ssub.s32 %s23, %s35
      %s105 = ssub.s32 %s24, %s31
      %s106 = sor.u32 %s104, %s105
      %p107 = scmp.eq.s32.totalorder %s106, 0
      %s109 = sadd.s32 %s108, 1
      %s110 = scalar_select %p107, %s108, %s109
      %p113 = pneg %p107
      %p114 = scmp.eq.s32.totalorder %s16, 3
      %p115 = por %p113, %p114
      %p116 = scmp.ne.s32.totalorder %s108, %s111
      %p117 = scmp.eq.s32.totalorder %s16, 0
      %p118 = por %p116, %p117
      %p119 = scmp.ne.s32.totalorder %s108, %s111
      %p120 = scmp.eq.s32.totalorder %s21, 3
      %p121 = por %p119, %p120
      %p122 = scmp.ne.s32.totalorder %s111, %s112
      %p123 = scmp.eq.s32.totalorder %s21, 0
      %p124 = por %p122, %p123
      %p125 = scmp.ne.s32.totalorder %s111, %s112
      %p126 = scmp.eq.s32.totalorder %s22, 3
      %p127 = por %p125, %p126
      %p129 = scmp.ne.s32.totalorder %s112, %s128
      %p130 = scmp.eq.s32.totalorder %s22, 0
      %p131 = por %p129, %p130
      %p132 = scmp.le.s32.totalorder 1, %s16
      %p133 = scmp.lt.s32.totalorder %s16, 5
      %p134 = pnand %p132, %p133
      %p135 = pneg %p134
      // Predicated region
      $region9: #{tpu_custom_call.1} parent=5 // pred_check
        _
      $region10: #{tpu_custom_call.1} parent=5 // pred_check_branch
        %137 = sbr.rel (%p134) target = $region12
      $region11: #{tpu_custom_call.1} parent=5 // pred_region
        %s138 = ssub.s32 %s16, 1
        // Predicated region
        $region13: #{tpu_custom_call.1} parent=11 // pred_check
          %p139 = pneg %p75
        $region14: #{tpu_custom_call.1} parent=11 // pred_check_branch
          %141 = sbr.rel (%p139) target = $region16
        $region15: #{tpu_custom_call.1} parent=11 // pred_region
          %143 = vsyncadd [#allocation6], 0
          %s144 = sshll.u32 %s1, 4
          %s145 = int_to_ptr.hbm [resolvable:$true] %s144
          %s146 = sshll.u32 [#allocation5], 4
          %s147 = int_to_ptr.vmem [resolvable:$true] %s146
          %152 = dma.hbm_to_vmem [thread:$0]  %s145, 6144, %s147, [#allocation6], 128, 128, 8
        $region16: #{tpu_custom_call.1} parent=11 // pred_fallthru
          _
        // Predicated region
        $region17: #{tpu_custom_call.1} parent=11 // pred_check
          %p153 = pneg %p96
        $region18: #{tpu_custom_call.1} parent=11 // pred_check_branch
          %155 = sbr.rel (%p153) target = $region20
        $region19: #{tpu_custom_call.1} parent=11 // pred_region
          _
        $region20: #{tpu_custom_call.1} parent=11 // pred_fallthru
          _
      $region12: #{tpu_custom_call.1} parent=5 // pred_fallthru
        _
      %p156 = scmp.lt.s32.totalorder %s16, 4
      // Predicated region
      $region21: #{tpu_custom_call.1} parent=5 // pred_check
        %p157 = pneg %p156
      $region22: #{tpu_custom_call.1} parent=5 // pred_check_branch
        %159 = sbr.rel (%p157) target = $region24
      $region23: #{tpu_custom_call.1} parent=5 // pred_region
        // Predicated region
        $region25: #{tpu_custom_call.1} parent=23 // pred_check
          %p160 = pneg %p48
        $region26: #{tpu_custom_call.1} parent=23 // pred_check_branch
          %162 = sbr.rel (%p160) target = $region28
        $region27: #{tpu_custom_call.1} parent=23 // pred_region
          %s163 = sand.u32 %s38, 1
          %s164 = scalar_lea.sflag [#allocation3], %s163
          %s165 = sand.u32 %s38, 1
          %s166 = smul.addr %s165, 16
          %s167 = scalar_lea.vmem [#allocation2], %s166
          %169 = vsyncadd %s164, 0
          %s170 = smul.addr %s23, 2
          %s171 = smul.addr %s170, 8
          %s172 = scalar_lea.hbm %s0, %s171
          %s173 = sshll.u32 %s172, 4
          %s174 = int_to_ptr.hbm [resolvable:$true] %s173
          %s175 = sshll.u32 %s167, 4
          %s176 = int_to_ptr.vmem [resolvable:$true] %s175
          %181 = dma.hbm_to_vmem [thread:$0]  %s174, 256, %s176, %s164, 128, 128, 8
        $region28: #{tpu_custom_call.1} parent=23 // pred_fallthru
          _
      $region24: #{tpu_custom_call.1} parent=5 // pred_fallthru
        _
      %p182 = scmp.le.s32.totalorder 1, %s16
      %p183 = scmp.lt.s32.totalorder %s16, 5
      %p184 = pnand %p182, %p183
      %p185 = pneg %p184
      // Predicated region
      $region29: #{tpu_custom_call.1} parent=5 // pred_check
        _
      $region30: #{tpu_custom_call.1} parent=5 // pred_check_branch
        %187 = sbr.rel (%p184) target = $region32
      $region31: #{tpu_custom_call.1} parent=5 // pred_region
        %s188 = ssub.s32 %s16, 1
        %s189 = sand.u32 %s41, 1
        %s190 = scalar_lea.sflag [#allocation3], %s189
        %s191 = sand.u32 %s41, 1
        %s192 = smul.addr %s191, 16
        %s193 = scalar_lea.vmem [#allocation2], %s192
        // Predicated region
        $region33: #{tpu_custom_call.1} parent=31 // pred_check
          %p194 = pneg %p54
        $region34: #{tpu_custom_call.1} parent=31 // pred_check_branch
          %196 = sbr.rel (%p194) target = $region36
        $region35: #{tpu_custom_call.1} parent=31 // pred_region
          %198 = dma.done %s190, 256
        $region36: #{tpu_custom_call.1} parent=31 // pred_fallthru
          _
        // Predicated region
        $region37: #{tpu_custom_call.1} parent=31 // pred_check
          %p199 = pneg %p75
        $region38: #{tpu_custom_call.1} parent=31 // pred_check_branch
          %201 = sbr.rel (%p199) target = $region40
        $region39: #{tpu_custom_call.1} parent=31 // pred_region
          %203 = dma.done [#allocation6], 6144
        $region40: #{tpu_custom_call.1} parent=31 // pred_fallthru
          _
        %s204 = sand.u32 %s41, 1
        %s205 = scalar_lea.sflag [#allocation3], %s204
        %s206 = sand.u32 %s41, 1
        %s207 = smul.addr %s206, 16
        %s208 = scalar_lea.vmem [#allocation2], %s207
        %p209 = pneg %p54
        %p210 = pneg %p51
        %p211 = pneg %p75
        %p212 = pneg %p72
        %p213 = pneg %p96
        %p214 = pneg %p93
        %p215 = pneg %p124
        %p216 = pneg %p121
        %s217 = sand.u32 %s111, 1
        %s218 = scalar_lea.sflag [#allocation4], %s217
        %s219 = sand.u32 %s111, 1
        %s220 = smul.addr %s219, 8
        %s221 = scalar_lea.vmem [#allocation7], %s220
        %s222 = smul.u32 %s26, 8
        %s223 = scalar_lea.vmem %s193, %s222 [#allocation2]
        %v224 = vld [vmem:[%s223] sm:$0xff]
        %s225 = ssub.s32 %s222, 1
        %p226 = scmp.gt.s32.totalorder %s225, 0
        %s227 = scalar_select %p226, %s225, 0
        %s228 = scalar_lea.vmem %s193, %s227 [#allocation2]
        %v229 = vld [vmem:[%s228] sm:$0x1]
        %p230 = scmp.gt.s32.totalorder %s222, 0
        %s231 = scalar_select %p230, 1, 0
        %s232 = scvt.s32.f32 %s231
        %v233 = vstv %s232
        %v234 = vmul.f32 %v229, %v233
        %v236 = vrot.slane %v224, 7
        %vm238 = vcmask 1040384
        %v239 = vsel %vm238, %v234, %v236
        %s240 = sadd.s32 %s222, 8
        %p241 = scmp.lt.s32.totalorder %s240, 15
        %s242 = scalar_select %p241, %s240, 15
        %s243 = scalar_lea.vmem %s193, %s242 [#allocation2]
        %v244 = vld [vmem:[%s243] sm:$0x1]
        %p245 = scmp.lt.s32.totalorder %s240, 16
        %s246 = scalar_select %p245, 1, 0
        %s247 = scvt.s32.f32 %s246
        %v248 = vstv %s247
        %v249 = vmul.f32 %v244, %v248
        %v250 = vrot.slane %v224, 1
        %v253 = vrot.slane %v249, 1
        %vm255 = vcmask 1046528
        %v256 = vsel %vm255, %v250, %v253
        %v257 = vld [vmem:[%s2] sm:$0x1]
        %s258 = scalar_lea.vmem [#allocation5], 128
        %v259 = vld [vmem:[%s258] sm:$0xff]
        %v260 = vld [vmem:[%s258 + $0x8] sm:$0xff]
        %v261 = vld [vmem:[%s258 + $0x10] sm:$0xff]
        %v262 = vld [vmem:[%s258 + $0x18] sm:$0xff]
        %v263 = vld [vmem:[%s258 + $0x20] sm:$0xff]
        %v264 = vld [vmem:[%s258 + $0x28] sm:$0xff]
        %v265 = vld [vmem:[%s258 + $0x30] sm:$0xff]
        %v266 = vld [vmem:[%s258 + $0x38] sm:$0xff]
        %v267 = vld [vmem:[%s258 + $0x40] sm:$0xff]
        %v268 = vld [vmem:[%s258 + $0x48] sm:$0xff]
        %v269 = vld [vmem:[%s258 + $0x50] sm:$0xff]
        %v270 = vld [vmem:[%s258 + $0x58] sm:$0xff]
        %v271 = vld [vmem:[%s258 + $0x60] sm:$0xff]
        %v272 = vld [vmem:[%s258 + $0x68] sm:$0xff]
        %v273 = vld [vmem:[%s258 + $0x70] sm:$0xff]
        %v274 = vld [vmem:[%s258 + $0x78] sm:$0xff]
        %275 = vmatpush.msra.mxu0 %v274
        %276 = vmatpush.msra.mxu0 %v273
        %277 = vmatpush.msra.mxu0 %v272
        %278 = vmatpush.msra.mxu0 %v271
        %279 = vmatpush.msra.mxu0 %v270
        %280 = vmatpush.msra.mxu0 %v269
        %281 = vmatpush.msra.mxu0 %v268
        %282 = vmatpush.msra.mxu0 %v267
        %283 = vmatpush.msra.mxu0 %v266
        %284 = vmatpush.msra.mxu0 %v265
        %285 = vmatpush.msra.mxu0 %v264
        %286 = vmatpush.msra.mxu0 %v263
        %287 = vmatpush.msra.mxu0 %v262
        %288 = vmatpush.msra.mxu0 %v261
        %289 = vmatpush.msra.mxu0 %v260
        %290 = vmatpush.msra.mxu0 %v259
        %291 = vmatmul.f32.gmra.mxu0 %v224
        %v292 = vpop.f32.mrf.mxu0
        %v293 = vadd.f32 0.0, %v292
        %294 = vdwg.mxu0
        %v296 = vperm.slane %v257, 0
        %v298 = vadd.f32 %v296, %v293
        %v299 = vld [vmem:[#allocation5] sm:$0xff]
        %v300 = vld [vmem:[#allocation5 + $0x8] sm:$0xff]
        %v301 = vld [vmem:[#allocation5 + $0x10] sm:$0xff]
        %v302 = vld [vmem:[#allocation5 + $0x18] sm:$0xff]
        %v303 = vld [vmem:[#allocation5 + $0x20] sm:$0xff]
        %v304 = vld [vmem:[#allocation5 + $0x28] sm:$0xff]
        %v305 = vld [vmem:[#allocation5 + $0x30] sm:$0xff]
        %v306 = vld [vmem:[#allocation5 + $0x38] sm:$0xff]
        %v307 = vld [vmem:[#allocation5 + $0x40] sm:$0xff]
        %v308 = vld [vmem:[#allocation5 + $0x48] sm:$0xff]
        %v309 = vld [vmem:[#allocation5 + $0x50] sm:$0xff]
        %v310 = vld [vmem:[#allocation5 + $0x58] sm:$0xff]
        %v311 = vld [vmem:[#allocation5 + $0x60] sm:$0xff]
        %v312 = vld [vmem:[#allocation5 + $0x68] sm:$0xff]
        %v313 = vld [vmem:[#allocation5 + $0x70] sm:$0xff]
        %v314 = vld [vmem:[#allocation5 + $0x78] sm:$0xff]
        %315 = vmatpush.msra.mxu0 %v314
        %316 = vmatpush.msra.mxu0 %v313
        %317 = vmatpush.msra.mxu0 %v312
        %318 = vmatpush.msra.mxu0 %v311
        %319 = vmatpush.msra.mxu0 %v310
        %320 = vmatpush.msra.mxu0 %v309
        %321 = vmatpush.msra.mxu0 %v308
        %322 = vmatpush.msra.mxu0 %v307
        %323 = vmatpush.msra.mxu0 %v306
        %324 = vmatpush.msra.mxu0 %v305
        %325 = vmatpush.msra.mxu0 %v304
        %326 = vmatpush.msra.mxu0 %v303
        %327 = vmatpush.msra.mxu0 %v302
        %328 = vmatpush.msra.mxu0 %v301
        %329 = vmatpush.msra.mxu0 %v300
        %330 = vmatpush.msra.mxu0 %v299
        %331 = vmatmul.f32.gmra.mxu0 %v239
        %v332 = vpop.f32.mrf.mxu0
        %v333 = vadd.f32 0.0, %v332
        %334 = vdwg.mxu0
        %v335 = vadd.f32 %v298, %v333
        %s336 = scalar_lea.vmem [#allocation5], 256
        %v337 = vld [vmem:[%s336] sm:$0xff]
        %v338 = vld [vmem:[%s336 + $0x8] sm:$0xff]
        %v339 = vld [vmem:[%s336 + $0x10] sm:$0xff]
        %v340 = vld [vmem:[%s336 + $0x18] sm:$0xff]
        %v341 = vld [vmem:[%s336 + $0x20] sm:$0xff]
        %v342 = vld [vmem:[%s336 + $0x28] sm:$0xff]
        %v343 = vld [vmem:[%s336 + $0x30] sm:$0xff]
        %v344 = vld [vmem:[%s336 + $0x38] sm:$0xff]
        %v345 = vld [vmem:[%s336 + $0x40] sm:$0xff]
        %v346 = vld [vmem:[%s336 + $0x48] sm:$0xff]
        %v347 = vld [vmem:[%s336 + $0x50] sm:$0xff]
        %v348 = vld [vmem:[%s336 + $0x58] sm:$0xff]
        %v349 = vld [vmem:[%s336 + $0x60] sm:$0xff]
        %v350 = vld [vmem:[%s336 + $0x68] sm:$0xff]
        %v351 = vld [vmem:[%s336 + $0x70] sm:$0xff]
        %v352 = vld [vmem:[%s336 + $0x78] sm:$0xff]
        %353 = vmatpush.msra.mxu0 %v352
        %354 = vmatpush.msra.mxu0 %v351
        %355 = vmatpush.msra.mxu0 %v350
        %356 = vmatpush.msra.mxu0 %v349
        %357 = vmatpush.msra.mxu0 %v348
        %358 = vmatpush.msra.mxu0 %v347
        %359 = vmatpush.msra.mxu0 %v346
        %360 = vmatpush.msra.mxu0 %v345
        %361 = vmatpush.msra.mxu0 %v344
        %362 = vmatpush.msra.mxu0 %v343
        %363 = vmatpush.msra.mxu0 %v342
        %364 = vmatpush.msra.mxu0 %v341
        %365 = vmatpush.msra.mxu0 %v340
        %366 = vmatpush.msra.mxu0 %v339
        %367 = vmatpush.msra.mxu0 %v338
        %368 = vmatpush.msra.mxu0 %v337
        %369 = vmatmul.f32.gmra.mxu0 %v256
        %v370 = vpop.f32.mrf.mxu0
        %v371 = vadd.f32 0.0, %v370
        %372 = vdwg.mxu0
        %v373 = vadd.f32 %v335, %v371
        %v374 = vadd.f32 %v224, %v373
        %375 = vst [vmem:[%s221] sm:$0xff] %v374
        %s376 = sand.u32 %s111, 1
        %s377 = scalar_lea.sflag [#allocation4], %s376
        %s378 = sand.u32 %s111, 1
        %s379 = smul.addr %s378, 8
        %s380 = scalar_lea.vmem [#allocation7], %s379
        // Predicated region
        $region41: #{tpu_custom_call.1} parent=31 // pred_check
          %p381 = pneg %p121
        $region42: #{tpu_custom_call.1} parent=31 // pred_check_branch
          %383 = sbr.rel (%p381) target = $region44
        $region43: #{tpu_custom_call.1} parent=31 // pred_region
          %385 = vsyncadd %s377, 0
          %s386 = smul.addr %s25, 2
          %s387 = sadd.s32 %s26, %s386
          %s388 = smul.addr %s387, 8
          %s389 = scalar_lea.hbm %s3, %s388
          %s391 = sshll.u32 %s380, 4
          %s392 = int_to_ptr.vmem [resolvable:$true] %s391
          %s393 = sshll.u32 %s389, 4
          %s394 = int_to_ptr.hbm [resolvable:$true] %s393
          %396 = dma.vmem_to_hbm [thread:$0]  %s392, 128, %s394, %s377
        $region44: #{tpu_custom_call.1} parent=31 // pred_fallthru
          _
      $region32: #{tpu_custom_call.1} parent=5 // pred_fallthru
        _
      %p397 = scmp.le.s32.totalorder 2, %s16
      // Predicated region
      $region45: #{tpu_custom_call.1} parent=5 // pred_check
        %p398 = pneg %p397
      $region46: #{tpu_custom_call.1} parent=5 // pred_check_branch
        %400 = sbr.rel (%p398) target = $region48
      $region47: #{tpu_custom_call.1} parent=5 // pred_region
        %s401 = ssub.s32 %s16, 2
        // Predicated region
        $region49: #{tpu_custom_call.1} parent=47 // pred_check
          %p402 = pneg %p127
        $region50: #{tpu_custom_call.1} parent=47 // pred_check_branch
          %404 = sbr.rel (%p402) target = $region52
        $region51: #{tpu_custom_call.1} parent=47 // pred_region
          %s405 = sand.u32 %s112, 1
          %s406 = scalar_lea.sflag [#allocation4], %s405
          %s407 = sand.u32 %s112, 1
          %s408 = smul.addr %s407, 8
          %s409 = scalar_lea.vmem [#allocation7], %s408
          %411 = dma.done %s406, 128
        $region52: #{tpu_custom_call.1} parent=47 // pred_fallthru
          _
      $region48: #{tpu_custom_call.1} parent=5 // pred_fallthru
        _
    $region6: #{tpu_custom_call.1} parent=1 // loop_footer
      %s20 = sadd.s32 1, %s16
    $region7: #{tpu_custom_call.1} parent=1 // loop_footer_branch
      %15 = sbr.rel target = $region3
    $region8: #{tpu_custom_call.1} parent=1 // loop_exit
      _
    %412 = vsyncpa [#allocation3], 1
    %s413 = scalar_lea.sflag [#allocation3], 1
    %414 = vsyncpa %s413, 1
    %415 = vsyncpa [#allocation6], 1
    %416 = vsyncpa [#allocation4], 1
    %s417 = scalar_lea.sflag [#allocation4], 1
    %418 = vsyncpa %s417, 1

</llo_original>
